<compile_context>
chip_gen: v5e
topology: v5e:2x2
jax: 0.10.0
libtpu: 0.0.40
codegen_flags: <defaults>
</compile_context>

<pallas_src>
import math

import jax
import jax.numpy as jnp
from jax.experimental import pallas as pl
from jax.experimental.pallas import tpu as pltpu


def _round_up(v, m):
    return (v + m - 1) // m * m


def _default_vmem_limit():
    """~0.75x physical VMEM (96 MiB on v5e/v6e, 48 MiB on v7x); safe fallback."""
    try:
        cap = int(pltpu.get_tpu_info().vmem_capacity_bytes)
        return int(cap * 3 // 4)
    except Exception:
        return 48 << 20   # conservative: fits under v7x's 64 MiB physical VMEM


def gnp_encoder_forward(x, adj, w1, w2, w3, *, tile_n=None,
                        mxu_dtype=jnp.bfloat16, vmem_limit_bytes=None):
    """Fused GCN encoder forward. Returns (z_mu, z_logvar) as f32 scalars."""
    n, d = x.shape
    hdim = w1.shape[1]
    zdim = w2.shape[1]
    assert adj.shape == (n, n)
    assert w1.shape == (d, hdim) and w2.shape == (hdim, zdim) and w3.shape == (hdim, zdim)

    itemsize = jnp.dtype(mxu_dtype).itemsize
    if vmem_limit_bytes is None:
        vmem_limit_bytes = _default_vmem_limit()
    budget = max(int(vmem_limit_bytes) - (4 << 20), 8 << 20)   # Mosaic-scratch headroom

    def _vmem_estimate(tn, npad):
        """Lane/sublane-padded VMEM footprint for a given row-tile size."""
        lane_h = _round_up(hdim, 128)
        lane_n = _round_up(npad, 128)
        adj_b = 2 * _round_up(tn, 16) * lane_n * itemsize      # adj tile, double-buffered
        s1_b = 2 * _round_up(npad, 16) * lane_h * itemsize     # support1 input (resident)
        s3_b = _round_up(zdim, 16) * lane_n * itemsize         # s3^T scratch (lane-dense)
        vec_b = 2 * 8 * lane_n * 4                             # colsum + hmu^T (f32)
        small = 2 << 20                                        # W3^T, rowsum(W2), outputs, LSE
        return adj_b + s1_b + s3_b + vec_b + small

    if tile_n is None:
        n_pad0 = _round_up(max(n, 1), 128)
        if _vmem_estimate(n_pad0, n_pad0) <= budget:
            tile_n = n_pad0                       # resident-adj path: one adj DMA total
        else:
            tile_n = 0
            for cand in (1024, 512, 256, 128):    # keep MXU-sized tiles, biggest that fits
                if _vmem_estimate(cand, _round_up(n, cand)) <= budget:
                    tile_n = cand
                    break
            if tile_n == 0:
                # TODO(synk): at very large N, k-tile the adj column (contraction) axis
                # instead of shrinking rows below 128 (MXU under-fill + grid-step overhead).
                cand = 64
                while cand > 16 and _vmem_estimate(cand, _round_up(n, cand)) > budget:
                    cand //= 2
                tile_n = cand
    else:
        tile_n = _round_up(max(int(tile_n), 16), 16)

    n_pad = _round_up(n, tile_n)
    num_tiles = n_pad // tile_n

    # Precompute in the wrapper (frees VMEM, removes the serial i==0 bubble, and
    # lets XLA schedule this tiny matmul outside the kernel).
    s1 = x.astype(jnp.float32) @ w1.astype(jnp.float32)          # (N, H) support1
    w2s = jnp.sum(w2.astype(jnp.float32), axis=1)[None, :]        # (1, H) rowsum(W2)

    # Zero-pad nodes: padded adj rows/cols are zero so they do not perturb the
    # colsum / mu reductions; padded logvar rows are masked in-kernel.
    if n_pad != n:
        s1 = jnp.pad(s1, ((0, n_pad - n), (0, 0)))
        adj = jnp.pad(adj, ((0, n_pad - n), (0, n_pad - n)))

    # TODO(synk): optional int8 (v5e/v6e) / fp8 (v7x) quantization of the adj stream
    # with a per-row scale; needs accuracy validation since exp(logvar) amplifies error.
    adj_c = adj.astype(mxu_dtype)
    s1_c = s1.astype(mxu_dtype)
    w3t_c = w3.T.astype(mxu_dtype)       # (Z, H) so every kernel matmul is NN/NT form
    w2s_c = w2s.astype(mxu_dtype)

    inv_count = 1.0 / float(n * zdim)
    log_count = math.log(float(n * zdim))

    def kernel(adj_ref, s1_ref, w3t_ref, w2s_ref,        # inputs
               zmu_ref, zlv_ref,                         # outputs
               s3t_ref, colsum_ref, hmut_ref,            # lane-dense VMEM scratch
               m_ref, s_ref):                            # (1,1) LSE state
        phase = pl.program_id(0)
        i = pl.program_id(1)
        row0 = pl.multiple_of(i * tile_n, tile_n)
        adj_t = adj_ref[...]                             # (tile_n, n_pad) bf16

        # ---- phase 0: stream hidden1 rows; emit s3^T, hmu^T, colsum(adj) --------
        @pl.when(phase == 0)
        def _phase0():
            @pl.when(i == 0)
            def _init0():
                colsum_ref[...] = jnp.zeros_like(colsum_ref)

            # hidden1 rows of this tile: relu(adj @ (x @ W1)), f32 accumulation.
            h = jnp.maximum(
                jnp.dot(adj_t, s1_ref[...],
                        preferred_element_type=jnp.float32), 0.0)    # (tile_n, H)
            h_bf = h.astype(mxu_dtype)

            # s3^T rows = (hidden1 @ W3)^T, produced directly transposed so the
            # scratch stays lane-dense ((Z, n_pad) instead of a 16x-padded (n_pad, Z)).
            s3_t = jax.lax.dot_general(
                w3t_ref[...], h_bf, (((1,), (1,)), ((), ())),
                preferred_element_type=jnp.float32)                   # (Z, tile_n)
            s3t_ref[:, pl.ds(row0, tile_n)] = s3_t.astype(mxu_dtype)

            # Per-row mu contribution: hidden1 @ rowsum(W2), stored lane-dense.
            hmu_t = jax.lax.dot_general(
                w2s_ref[...], h_bf, (((1,), (1,)), ((), ())),
                preferred_element_type=jnp.float32)                   # (1, tile_n)
            hmut_ref[:, pl.ds(row0, tile_n)] = hmu_t

            # colsum(adj) on the MXU (no f32 upcast / copy of the whole adj tile).
            ones_row = jnp.ones((1, tile_n), dtype=mxu_dtype)
            colsum_ref[...] += jnp.dot(ones_row, adj_t,
                                       preferred_element_type=jnp.float32)

            @pl.when(i == num_tiles - 1)
            def _finalize0():
                # mean(mu) = colsum(adj) . (hidden1 @ rowsum(W2)) / (N * Z)
                zmu_ref[...] = jnp.sum(colsum_ref[...] * hmut_ref[...],
                                       keepdims=True) * inv_count

        # ---- phase 1: logvar = adj @ s3, streaming log-mean-exp ------------------
        @pl.when(phase == 1)
        def _phase1():
            @pl.when(i == 0)
            def _init1():
                m_ref[...] = jnp.full_like(m_ref, -jnp.inf)   # running max
                s_ref[...] = jnp.zeros_like(s_ref)            # running sum(exp(lv - max))

            lv = jax.lax.dot_general(
                adj_t, s3t_ref[...], (((1,), (1,)), ((), ())),
                preferred_element_type=jnp.float32)                   # (tile_n, Z)
            rows = row0 + jax.lax.broadcasted_iota(jnp.int32, lv.shape, 0)
            lv = jnp.where(rows < n, lv, -jnp.inf)    # mask zero-padded nodes

            m_old = m_ref[...]                                        # (1, 1)
            s_old = s_ref[...]                                        # (1, 1)
            m_new = jnp.maximum(m_old, jnp.max(lv, keepdims=True))    # (1, 1)
            s_new = (s_old * jnp.exp(m_old - m_new)
                     + jnp.sum(jnp.exp(lv - m_new), keepdims=True))
            m_ref[...] = m_new
            s_ref[...] = s_new

            @pl.when(i == num_tiles - 1)
            def _finalize1():
                # log(mean(exp(logvar))) = max + log(sum(exp(lv - max))) - log(N*Z)
                zlv_ref[...] = m_new + jnp.log(s_new) - log_count

    grid_spec = pltpu.PrefetchScalarGridSpec(
        num_scalar_prefetch=0,
        grid=(2, num_tiles),
        in_specs=[
            # adj row tiles; when tile_n == n_pad the block index is constant, so
            # adj is DMA'd from HBM exactly once and stays resident for both phases.
            pl.BlockSpec((tile_n, n_pad), lambda p, i: (i, 0)),
            pl.BlockSpec((n_pad, hdim), lambda p, i: (0, 0)),     # support1 = x @ W1
            pl.BlockSpec((zdim, hdim), lambda p, i: (0, 0)),      # W3^T
            pl.BlockSpec((1, hdim), lambda p, i: (0, 0)),         # rowsum(W2)
        ],
        out_specs=(
            pl.BlockSpec((1, 1), lambda p, i: (0, 0)),
            pl.BlockSpec((1, 1), lambda p, i: (0, 0)),
        ),
        scratch_shapes=[
            pltpu.VMEM((zdim, n_pad), mxu_dtype),     # s3^T = (hidden1 @ W3)^T
            pltpu.VMEM((1, n_pad), jnp.float32),      # colsum(adj) accumulator
            pltpu.VMEM((1, n_pad), jnp.float32),      # hmu^T = (hidden1 @ rowsum(W2))^T
            pltpu.VMEM((1, 1), jnp.float32),          # LSE running max
            pltpu.VMEM((1, 1), jnp.float32),          # LSE running sum
        ],
    )

    zmu, zlv = pl.pallas_call(
        kernel,
        out_shape=(
            jax.ShapeDtypeStruct((1, 1), jnp.float32),
            jax.ShapeDtypeStruct((1, 1), jnp.float32),
        ),
        grid_spec=grid_spec,
        compiler_params=pltpu.CompilerParams(
            # Both axes must be 'arbitrary': phase 1 depends on phase-0 scratch and
            # the row-tile axis carries the colsum / log-sum-exp reductions.
            # TODO(synk): v7x megacore split of the row-tile axis (per-core colsum/LSE
            # partials combined in the wrapper) would use the second TensorCore.
            dimension_semantics=("arbitrary", "arbitrary"),
            vmem_limit_bytes=int(vmem_limit_bytes),
        ),
    )(adj_c, s1_c, w3t_c, w2s_c)

    return zmu[0, 0], zlv[0, 0]


def _glorot(key, shape):
    """Glorot-uniform init matching torch GraphConvolution.reset_parameters."""
    fan_in, fan_out = shape
    limit = jnp.sqrt(6.0 / (fan_in + fan_out))
    return jax.random.uniform(key, shape, jnp.float32, -limit, limit)


def _reference(x, adj, w1, w2, w3):
    """Pure-JAX f32 reference of the PyTorch forward (eval mode)."""
    hidden1 = jnp.maximum(adj @ (x @ w1), 0.0)
    mu = adj @ (hidden1 @ w2)
    logvar = adj @ (hidden1 @ w3)
    return jnp.mean(mu), jnp.log(jnp.mean(jnp.exp(logvar)))


if __name__ == "__main__":
    # Shapes implied by the module: N nodes, input_dim, hidden_dim1, z_dim.
    # DROPOUT is inert in eval mode.
    # TODO(synk): dropout only affects training mode; eval-mode forward implemented.
    INPUT_DIM, HIDDEN_DIM1, Z_DIM = 32, 16, 8

    def run_case(key, n, tile_n):
        kx, kadj, k1, k2, k3 = jax.random.split(key, 5)
        x = jax.random.normal(kx, (n, INPUT_DIM), jnp.float32)
        # Symmetric, row-normalized adjacency with self loops (typical GCN preprocessing).
        a = (jax.random.uniform(kadj, (n, n)) > 0.6).astype(jnp.float32)
        a = jnp.maximum(a, a.T) + jnp.eye(n, dtype=jnp.float32)
        adj = a / jnp.sum(a, axis=1, keepdims=True)
        w1 = _glorot(k1, (INPUT_DIM, HIDDEN_DIM1))
        w2 = _glorot(k2, (HIDDEN_DIM1, Z_DIM))
        w3 = _glorot(k3, (HIDDEN_DIM1, Z_DIM))

        z_mu, z_logvar = gnp_encoder_forward(x, adj, w1, w2, w3, tile_n=tile_n)
        jax.block_until_ready((z_mu, z_logvar))

        ref_mu, ref_logvar = _reference(x, adj, w1, w2, w3)
        # bf16 MXU inputs (f32 accumulation) => loosened tolerance vs the f32 reference.
        assert jnp.allclose(z_mu, ref_mu, atol=3e-2, rtol=3e-2), (z_mu, ref_mu)
        assert jnp.allclose(z_logvar, ref_logvar, atol=3e-2, rtol=3e-2), (z_logvar, ref_logvar)

    key = jax.random.PRNGKey(0)
    key1, key2 = jax.random.split(key)
    # Case 1: auto tiling -> resident-adj path (adj fits VMEM, single row tile, one DMA).
    run_case(key1, n=40, tile_n=None)
    # Case 2: forced tile_n=128 -> multi-tile streaming path (3 row tiles, padded last tile).
    run_case(key2, n=300, tile_n=128)

    print("KERNEL_OK")
</pallas_src>

<mosaic_0001>
module attributes {stable_mosaic.version = 11 : i64} {
  func.func @kernel(%arg0: i32, %arg1: i32, %arg2: memref<128x128xbf16, #tpu.memory_space<vmem>>, %arg3: memref<128x16xbf16, #tpu.memory_space<vmem>>, %arg4: memref<8x16xbf16, #tpu.memory_space<vmem>>, %arg5: memref<1x16xbf16, #tpu.memory_space<vmem>>, %arg6: memref<1x1xf32, #tpu.memory_space<vmem>>, %arg7: memref<1x1xf32, #tpu.memory_space<vmem>>, %arg8: memref<8x128xbf16, #tpu.memory_space<vmem>>, %arg9: memref<1x128xf32, #tpu.memory_space<vmem>>, %arg10: memref<1x128xf32, #tpu.memory_space<vmem>>, %arg11: memref<1x1xf32, #tpu.memory_space<vmem>>, %arg12: memref<1x1xf32, #tpu.memory_space<vmem>>) attributes {dimension_semantics = [#tpu.dimension_semantics<arbitrary>, #tpu.dimension_semantics<arbitrary>], iteration_bounds = array<i64: 2, 1>, scalar_prefetch = 0 : i64, scratch_operands = 5 : i64, tpu.core_type = #tpu.core_type<tc>, window_params = [{transform_indices = @transform_0, window_bounds = array<i64: 128, 128>}, {pipeline_mode = #tpu.pipeline_mode<synchronous>, transform_indices = @transform_1, window_bounds = array<i64: 128, 16>}, {pipeline_mode = #tpu.pipeline_mode<synchronous>, transform_indices = @transform_2, window_bounds = array<i64: 8, 16>}, {pipeline_mode = #tpu.pipeline_mode<synchronous>, transform_indices = @transform_3, window_bounds = array<i64: 1, 16>}, {pipeline_mode = #tpu.pipeline_mode<synchronous>, transform_indices = @transform_4, window_bounds = array<i64: 1, 1>}, {pipeline_mode = #tpu.pipeline_mode<synchronous>, transform_indices = @transform_5, window_bounds = array<i64: 1, 1>}]} {
    %c128_i32 = arith.constant 128 : i32
    %0 = arith.muli %arg1, %c128_i32 : i32
    %1 = tpu.assume_multiple %0, 128 : i32
    %c0 = arith.constant 0 : index
    %c0_0 = arith.constant 0 : index
    %2 = vector.load %arg2[%c0, %c0_0] : memref<128x128xbf16, #tpu.memory_space<vmem>>, vector<128x128xbf16>
    %c0_i32 = arith.constant 0 : i32
    %3 = arith.cmpi eq, %arg0, %c0_i32 : i32
    %4 = arith.extui %3 : i1 to i32
    %c0_i32_1 = arith.constant 0 : i32
    %5 = arith.cmpi ne, %4, %c0_i32_1 : i32
    scf.if %5 {
      %c0_i32_3 = arith.constant 0 : i32
      %9 = arith.cmpi eq, %arg1, %c0_i32_3 : i32
      %10 = arith.extui %9 : i1 to i32
      %c0_i32_4 = arith.constant 0 : i32
      %11 = arith.cmpi ne, %10, %c0_i32_4 : i32
      scf.if %11 {
        %cst_24 = arith.constant 0.000000e+00 : f32
        %34 = vector.broadcast %cst_24 : f32 to vector<1x128xf32>
        %c0_25 = arith.constant 0 : index
        %c0_26 = arith.constant 0 : index
        %35 = vector.load %arg9[%c0_25, %c0_26] : memref<1x128xf32, #tpu.memory_space<vmem>>, vector<1x128xf32>
        tpu.vector_store %arg9[%c0_25, %c0_26], %34 {strides = array<i32>} : memref<1x128xf32, #tpu.memory_space<vmem>>, vector<1x128xf32>,
      } else {
      }
      %c0_5 = arith.constant 0 : index
      %c0_6 = arith.constant 0 : index
      %12 = vector.load %arg3[%c0_5, %c0_6] : memref<128x16xbf16, #tpu.memory_space<vmem>>, vector<128x16xbf16>
      %cst = arith.constant dense<0.000000e+00> : vector<128x16xf32>
      %13 = tpu.matmul %2, %12, %cst {dimension_numbers = #tpu.dot_dimension_numbers<[1], [0], [0], [1], [0, 0, 1, 1], [], []>} : vector<128x128xbf16>, vector<128x16xbf16>, vector<128x16xf32> -> vector<128x16xf32>
      %cst_7 = arith.constant 0.000000e+00 : f32
      %14 = vector.broadcast %cst_7 : f32 to vector<128x16xf32>
      %15 = arith.maximumf %13, %14 : vector<128x16xf32>
      %16 = arith.truncf %15 : vector<128x16xf32> to vector<128x16xbf16>
      %c0_8 = arith.constant 0 : index
      %c0_9 = arith.constant 0 : index
      %17 = vector.load %arg4[%c0_8, %c0_9] : memref<8x16xbf16, #tpu.memory_space<vmem>>, vector<8x16xbf16>
      %cst_10 = arith.constant dense<0.000000e+00> : vector<8x128xf32>
      %18 = tpu.matmul %17, %16, %cst_10 {dimension_numbers = #tpu.dot_dimension_numbers<[1], [1], [0], [0], [0, 0, 1, 0], [], []>} : vector<8x16xbf16>, vector<128x16xbf16>, vector<8x128xf32> -> vector<8x128xf32>
      %19 = arith.truncf %18 : vector<8x128xf32> to vector<8x128xbf16>
      %c0_11 = arith.constant 0 : index
      %20 = arith.index_cast %1 : i32 to index
      %21 = vector.load %arg8[%c0_11, %20] : memref<8x128xbf16, #tpu.memory_space<vmem>>, vector<8x128xbf16>
      tpu.vector_store %arg8[%c0_11, %20], %19 {strides = array<i32>} : memref<8x128xbf16, #tpu.memory_space<vmem>>, vector<8x128xbf16>,
      %c0_12 = arith.constant 0 : index
      %c0_13 = arith.constant 0 : index
      %22 = vector.load %arg5[%c0_12, %c0_13] : memref<1x16xbf16, #tpu.memory_space<vmem>>, vector<1x16xbf16>
      %cst_14 = arith.constant dense<0.000000e+00> : vector<1x128xf32>
      %23 = tpu.matmul %22, %16, %cst_14 {dimension_numbers = #tpu.dot_dimension_numbers<[1], [1], [0], [0], [0, 0, 1, 0], [], []>} : vector<1x16xbf16>, vector<128x16xbf16>, vector<1x128xf32> -> vector<1x128xf32>
      %c0_15 = arith.constant 0 : index
      %24 = arith.index_cast %1 : i32 to index
      %25 = vector.load %arg10[%c0_15, %24] : memref<1x128xf32, #tpu.memory_space<vmem>>, vector<1x128xf32>
      tpu.vector_store %arg10[%c0_15, %24], %23 {strides = array<i32>} : memref<1x128xf32, #tpu.memory_space<vmem>>, vector<1x128xf32>,
      %cst_16 = arith.constant 1.000000e+00 : bf16
      %26 = vector.broadcast %cst_16 : bf16 to vector<1x128xbf16>
      %c0_17 = arith.constant 0 : index
      %c0_18 = arith.constant 0 : index
      %27 = vector.load %arg9[%c0_17, %c0_18] : memref<1x128xf32, #tpu.memory_space<vmem>>, vector<1x128xf32>
      %cst_19 = arith.constant dense<0.000000e+00> : vector<1x128xf32>
      %28 = tpu.matmul %26, %2, %cst_19 {dimension_numbers = #tpu.dot_dimension_numbers<[1], [0], [0], [1], [0, 0, 1, 1], [], []>} : vector<1x128xbf16>, vector<128x128xbf16>, vector<1x128xf32> -> vector<1x128xf32>
      %29 = arith.addf %27, %28 : vector<1x128xf32>
      %c0_20 = arith.constant 0 : index
      %c0_21 = arith.constant 0 : index
      %30 = vector.load %arg9[%c0_20, %c0_21] : memref<1x128xf32, #tpu.memory_space<vmem>>, vector<1x128xf32>
      tpu.vector_store %arg9[%c0_20, %c0_21], %29 {strides = array<i32>} : memref<1x128xf32, #tpu.memory_space<vmem>>, vector<1x128xf32>,
      %c0_i32_22 = arith.constant 0 : i32
      %31 = arith.cmpi eq, %arg1, %c0_i32_22 : i32
      %32 = arith.extui %31 : i1 to i32
      %c0_i32_23 = arith.constant 0 : i32
      %33 = arith.cmpi ne, %32, %c0_i32_23 : i32
      scf.if %33 {
        %c0_24 = arith.constant 0 : index
        %c0_25 = arith.constant 0 : index
        %34 = vector.load %arg9[%c0_24, %c0_25] : memref<1x128xf32, #tpu.memory_space<vmem>>, vector<1x128xf32>
        %c0_26 = arith.constant 0 : index
        %c0_27 = arith.constant 0 : index
        %35 = vector.load %arg10[%c0_26, %c0_27] : memref<1x128xf32, #tpu.memory_space<vmem>>, vector<1x128xf32>
        %36 = arith.mulf %34, %35 : vector<1x128xf32>
        %37 = vector.shape_cast %36 : vector<1x128xf32> to vector<1x1x128xf32>
        %cst_28 = arith.constant dense<0.000000e+00> : vector<1xf32>
        %38 = vector.multi_reduction <add>, %37, %cst_28 [1, 2] : vector<1x1x128xf32> to vector<1xf32>
        %39 = vector.shape_cast %38 : vector<1xf32> to vector<1x1x1xf32>
        %40 = vector.extract %39[0, 0, 0] : f32 from vector<1x1x1xf32>
        %41 = vector.broadcast %40 : f32 to vector<1x1xf32>
        %cst_29 = arith.constant 3.125000e-03 : f32
        %42 = vector.broadcast %cst_29 : f32 to vector<1x1xf32>
        %43 = arith.mulf %41, %42 : vector<1x1xf32>
        %c0_30 = arith.constant 0 : index
        %c0_31 = arith.constant 0 : index
        %44 = vector.load %arg6[%c0_30, %c0_31] : memref<1x1xf32, #tpu.memory_space<vmem>>, vector<1x1xf32>
        tpu.vector_store %arg6[%c0_30, %c0_31], %43 {strides = array<i32>} : memref<1x1xf32, #tpu.memory_space<vmem>>, vector<1x1xf32>,
      } else {
      }
    } else {
    }
    %c1_i32 = arith.constant 1 : i32
    %6 = arith.cmpi eq, %arg0, %c1_i32 : i32
    %7 = arith.extui %6 : i1 to i32
    %c0_i32_2 = arith.constant 0 : i32
    %8 = arith.cmpi ne, %7, %c0_i32_2 : i32
    scf.if %8 {
      %c0_i32_3 = arith.constant 0 : i32
      %9 = arith.cmpi eq, %arg1, %c0_i32_3 : i32
      %10 = arith.extui %9 : i1 to i32
      %c0_i32_4 = arith.constant 0 : i32
      %11 = arith.cmpi ne, %10, %c0_i32_4 : i32
      scf.if %11 {
        %cst_20 = arith.constant 0xFF800000 : f32
        %46 = vector.broadcast %cst_20 : f32 to vector<1x1xf32>
        %c0_21 = arith.constant 0 : index
        %c0_22 = arith.constant 0 : index
        %47 = vector.load %arg11[%c0_21, %c0_22] : memref<1x1xf32, #tpu.memory_space<vmem>>, vector<1x1xf32>
        tpu.vector_store %arg11[%c0_21, %c0_22], %46 {strides = array<i32>} : memref<1x1xf32, #tpu.memory_space<vmem>>, vector<1x1xf32>,
        %cst_23 = arith.constant 0.000000e+00 : f32
        %48 = vector.broadcast %cst_23 : f32 to vector<1x1xf32>
        %c0_24 = arith.constant 0 : index
        %c0_25 = arith.constant 0 : index
        %49 = vector.load %arg12[%c0_24, %c0_25] : memref<1x1xf32, #tpu.memory_space<vmem>>, vector<1x1xf32>
        tpu.vector_store %arg12[%c0_24, %c0_25], %48 {strides = array<i32>} : memref<1x1xf32, #tpu.memory_space<vmem>>, vector<1x1xf32>,
      } else {
      }
      %c0_5 = arith.constant 0 : index
      %c0_6 = arith.constant 0 : index
      %12 = vector.load %arg8[%c0_5, %c0_6] : memref<8x128xbf16, #tpu.memory_space<vmem>>, vector<8x128xbf16>
      %cst = arith.constant dense<0.000000e+00> : vector<128x8xf32>
      %13 = tpu.matmul %2, %12, %cst {dimension_numbers = #tpu.dot_dimension_numbers<[1], [1], [0], [0], [0, 0, 1, 0], [], []>} : vector<128x128xbf16>, vector<8x128xbf16>, vector<128x8xf32> -> vector<128x8xf32>
      %14 = tpu.iota {dimensions = array<i32: 0>} : vector<128x8xi32>
      %15 = vector.broadcast %1 : i32 to vector<128x8xi32>
      %16 = arith.addi %15, %14 : vector<128x8xi32>
      %c40_i32 = arith.constant 40 : i32
      %17 = vector.broadcast %c40_i32 : i32 to vector<128x8xi32>
      %18 = arith.cmpi slt, %16, %17 : vector<128x8xi32>
      %cst_7 = arith.constant 0xFF800000 : f32
      %19 = vector.broadcast %cst_7 : f32 to vector<128x8xf32>
      %20 = arith.select %18, %13, %19 : vector<128x8xi1>, vector<128x8xf32>
      %c0_8 = arith.constant 0 : index
      %c0_9 = arith.constant 0 : index
      %21 = vector.load %arg11[%c0_8, %c0_9] : memref<1x1xf32, #tpu.memory_space<vmem>>, vector<1x1xf32>
      %c0_10 = arith.constant 0 : index
      %c0_11 = arith.constant 0 : index
      %22 = vector.load %arg12[%c0_10, %c0_11] : memref<1x1xf32, #tpu.memory_space<vmem>>, vector<1x1xf32>
      %23 = vector.shape_cast %20 : vector<128x8xf32> to vector<1x128x8xf32>
      %cst_12 = arith.constant dense<0xFF800000> : vector<1xf32>
      %24 = vector.multi_reduction <maximumf>, %23, %cst_12 [1, 2] : vector<1x128x8xf32> to vector<1xf32>
      %25 = vector.shape_cast %24 : vector<1xf32> to vector<1x1x1xf32>
      %26 = vector.extract %25[0, 0, 0] : f32 from vector<1x1x1xf32>
      %27 = vector.broadcast %26 : f32 to vector<1x1xf32>
      %28 = arith.maximumf %21, %27 : vector<1x1xf32>
      %29 = arith.subf %21, %28 : vector<1x1xf32>
      %30 = math.exp %29 : vector<1x1xf32>
      %31 = arith.mulf %22, %30 : vector<1x1xf32>
      %32 = vector.broadcast %28 : vector<1x1xf32> to vector<128x8xf32>
      %33 = arith.subf %20, %32 : vector<128x8xf32>
      %34 = math.exp %33 : vector<128x8xf32>
      %35 = vector.shape_cast %34 : vector<128x8xf32> to vector<1x128x8xf32>
      %cst_13 = arith.constant dense<0.000000e+00> : vector<1xf32>
      %36 = vector.multi_reduction <add>, %35, %cst_13 [1, 2] : vector<1x128x8xf32> to vector<1xf32>
      %37 = vector.shape_cast %36 : vector<1xf32> to vector<1x1x1xf32>
      %38 = vector.extract %37[0, 0, 0] : f32 from vector<1x1x1xf32>
      %39 = vector.broadcast %38 : f32 to vector<1x1xf32>
      %40 = arith.addf %31, %39 : vector<1x1xf32>
      %c0_14 = arith.constant 0 : index
      %c0_15 = arith.constant 0 : index
      %41 = vector.load %arg11[%c0_14, %c0_15] : memref<1x1xf32, #tpu.memory_space<vmem>>, vector<1x1xf32>
      tpu.vector_store %arg11[%c0_14, %c0_15], %28 {strides = array<i32>} : memref<1x1xf32, #tpu.memory_space<vmem>>, vector<1x1xf32>,
      %c0_16 = arith.constant 0 : index
      %c0_17 = arith.constant 0 : index
      %42 = vector.load %arg12[%c0_16, %c0_17] : memref<1x1xf32, #tpu.memory_space<vmem>>, vector<1x1xf32>
      tpu.vector_store %arg12[%c0_16, %c0_17], %40 {strides = array<i32>} : memref<1x1xf32, #tpu.memory_space<vmem>>, vector<1x1xf32>,
      %c0_i32_18 = arith.constant 0 : i32
      %43 = arith.cmpi eq, %arg1, %c0_i32_18 : i32
      %44 = arith.extui %43 : i1 to i32
      %c0_i32_19 = arith.constant 0 : i32
      %45 = arith.cmpi ne, %44, %c0_i32_19 : i32
      scf.if %45 {
        %46 = math.log %40 : vector<1x1xf32>
        %47 = arith.addf %28, %46 : vector<1x1xf32>
        %cst_20 = arith.constant 5.76832104 : f32
        %48 = vector.broadcast %cst_20 : f32 to vector<1x1xf32>
        %49 = arith.subf %47, %48 : vector<1x1xf32>
        %c0_21 = arith.constant 0 : index
        %c0_22 = arith.constant 0 : index
        %50 = vector.load %arg7[%c0_21, %c0_22] : memref<1x1xf32, #tpu.memory_space<vmem>>, vector<1x1xf32>
        tpu.vector_store %arg7[%c0_21, %c0_22], %49 {strides = array<i32>} : memref<1x1xf32, #tpu.memory_space<vmem>>, vector<1x1xf32>,
      } else {
      }
    } else {
    }
    return
  }
  func.func @transform_0(%arg0: i32, %arg1: i32) -> (i32, i32) {
    %c0_i32 = arith.constant 0 : i32
    %c0_i32_0 = arith.constant 0 : i32
    return %arg1, %c0_i32 : i32, i32
  }
  func.func @transform_1(%arg0: i32, %arg1: i32) -> (i32, i32) {
    %c0_i32 = arith.constant 0 : i32
    %c0_i32_0 = arith.constant 0 : i32
    %c0_i32_1 = arith.constant 0 : i32
    return %c0_i32, %c0_i32_0 : i32, i32
  }
  func.func @transform_2(%arg0: i32, %arg1: i32) -> (i32, i32) {
    %c0_i32 = arith.constant 0 : i32
    %c0_i32_0 = arith.constant 0 : i32
    %c0_i32_1 = arith.constant 0 : i32
    return %c0_i32, %c0_i32_0 : i32, i32
  }
  func.func @transform_3(%arg0: i32, %arg1: i32) -> (i32, i32) {
    %c0_i32 = arith.constant 0 : i32
    %c0_i32_0 = arith.constant 0 : i32
    %c0_i32_1 = arith.constant 0 : i32
    return %c0_i32, %c0_i32_0 : i32, i32
  }
  func.func @transform_4(%arg0: i32, %arg1: i32) -> (i32, i32) {
    %c0_i32 = arith.constant 0 : i32
    %c0_i32_0 = arith.constant 0 : i32
    %c0_i32_1 = arith.constant 0 : i32
    return %c0_i32, %c0_i32_0 : i32, i32
  }
  func.func @transform_5(%arg0: i32, %arg1: i32) -> (i32, i32) {
    %c0_i32 = arith.constant 0 : i32
    %c0_i32_0 = arith.constant 0 : i32
    %c0_i32_1 = arith.constant 0 : i32
    return %c0_i32, %c0_i32_0 : i32, i32
  }
}

</mosaic_0001>

<llo_original>
// kernel: tpu_custom_call.1
$region0: #{tpu_custom_call.1}
  #allocation0 [shape = 'u32[]', space=smem, size = 0x4, offset = 0x4, fixed_abs, tag = 'smem constant byte address 0x4 - core index']
  #allocation1 [shape = 'u32[72,128]{1,0:T(1,128)}', space=vmem, size = 0x9000, scoped, tag = 'internal scratch']
  #allocation2 [shape = 'bf16[8,128]{1,0:T(8,128)(2,1)}', space=vmem, size = 0x800, scoped, tag = 'scratch operand']
  #allocation3 [shape = 'f32[1,128]{1,0:T(1,128)}', space=vmem, size = 0x200, scoped, tag = 'scratch operand']
  #allocation4 [shape = 'f32[1,128]{1,0:T(1,128)}', space=vmem, size = 0x200, scoped, tag = 'scratch operand']
  #allocation5 [shape = 'f32[1,1]{1,0:T(1,128)}', space=vmem, size = 0x200, scoped, tag = 'scratch operand']
  #allocation6 [shape = 'f32[1,1]{1,0:T(1,128)}', space=vmem, size = 0x200, scoped, tag = 'scratch operand']
  %s0 = inlined_call_operand.vmem [shape: bf16[128,128], index: 0, kind: input, shape index: {}]
  %s1 = inlined_call_operand.vmem [shape: bf16[128,16], index: 1, kind: input, shape index: {}]
  %s2 = inlined_call_operand.vmem [shape: bf16[8,16], index: 2, kind: input, shape index: {}]
  %s3 = inlined_call_operand.vmem [shape: bf16[1,16], index: 3, kind: input, shape index: {}]
  %s4 = inlined_call_operand.hbm [shape: f32[1,1], index: 4, kind: output, shape index: {0}]
  %s5 = inlined_call_operand.hbm [shape: f32[1,1], index: 5, kind: output, shape index: {1}]
  %6 = xla_tuple %s4, %s5
  %s7 = sld [smem:[#allocation0]]
  $region81: #{tpu_custom_call.1} parent=0
    _
  %s9 = ssub.s32 1, %s7
  %s10 = scalar_select 0, %s9, %s7
  $region1: #{tpu_custom_call.1} parent=0
    #allocation7 [shape = 'u8[512]{0}', space=vmem, size = 0x400, scoped, tag = 'output window, operand 0, single buffered']
    #allocation8 [shape = 's32[2]{0}', space=sflag, size = 0x8, scoped, tag = 'scoped memory for tpu_custom_call.1']
    #allocation9 [shape = 'u8[512]{0}', space=vmem, size = 0x400, scoped, tag = 'output window, operand 1, single buffered']
    #allocation10 [shape = 's32[1]{0}', space=sflag, size = 0x4, scoped, tag = 'scoped memory for tpu_custom_call.1']
    %11 = vsyncpa [#allocation8], 0
    %12 = vsyncpa [#allocation10], 0
    loop: start=0, step=1, limit=4
    $region2: #{tpu_custom_call.1} parent=1 // loop_pre_header
      _
    $region3: #{tpu_custom_call.1} parent=1 // loop_header
      %s14 = sphi 0, %s18
      %p15 = scmp.ge.s32.totalorder %s14, 4
      %s21 = sphi 0, %s33
      %s22 = sphi 0, %s29
      %s23 = sphi 0, %s21
      %s24 = sphi 0, %s22
      %s25 = sphi 0, %s23
      %s26 = sphi 0, %s24
      %s36 = sphi 0, %s38
      %s39 = sphi 0, %s36
      %s40 = sphi 0, %s39
      %s56 = sphi 0, %s40
      %s60 = sphi 0, %s60
      %s62 = sphi 0, %s60
      %s63 = sphi 0, %s62
      %s77 = sphi 0, %s63
      %s81 = sphi 0, %s81
      %s83 = sphi 0, %s81
      %s84 = sphi 0, %s83
      %s98 = sphi 0, %s84
      %s102 = sphi 0, %s102
      %s104 = sphi 0, %s102
      %s105 = sphi 0, %s104
      %s119 = sphi 0, %s105
      %s123 = sphi 0, %s123
      %s125 = sphi 0, %s123
      %s126 = sphi 0, %s125
      %s140 = sphi 0, %s126
      %s144 = sphi 0, %s144
      %s146 = sphi 0, %s144
      %s147 = sphi 0, %s146
      %s161 = sphi 0, %s147
    $region4: #{tpu_custom_call.1} parent=1 // loop_header_branch
      %17 = sbr.rel (%p15) target = $region8
    $region5: #{tpu_custom_call.1} parent=1 // loop_body
      %s19 = ssub.s32 %s14, 1
      %s20 = ssub.s32 %s14, 2
      %s27 = sadd.s32 1, %s22
      %p28 = scmp.ge.s32.totalorder %s27, 1
      %s29 = scalar_select %p28, 0, %s27
      %s30 = sadd.s32 1, %s21
      %s31 = scalar_select %p28, %s30, %s21
      %p32 = scmp.ge.s32.totalorder %s31, 2
      %s33 = scalar_select %p32, 0, %s31
      %s34 = ssub.s32 %s22, %s29
      %p35 = scmp.eq.s32.totalorder %s34, 0
      %s37 = sadd.s32 %s36, 1
      %s38 = scalar_select %p35, %s36, %s37
      %p41 = pneg %p35
      %p42 = scmp.eq.s32.totalorder %s14, 1
      %p43 = por %p41, %p42
      %p44 = scmp.ne.s32.totalorder %s36, %s39
      %p45 = scmp.eq.s32.totalorder %s14, 0
      %p46 = por %p44, %p45
      %p47 = scmp.ne.s32.totalorder %s36, %s39
      %p48 = scmp.eq.s32.totalorder %s19, 1
      %p49 = por %p47, %p48
      %p50 = scmp.ne.s32.totalorder %s39, %s40
      %p51 = scmp.eq.s32.totalorder %s19, 0
      %p52 = por %p50, %p51
      %p53 = scmp.ne.s32.totalorder %s39, %s40
      %p54 = scmp.eq.s32.totalorder %s20, 1
      %p55 = por %p53, %p54
      %p57 = scmp.ne.s32.totalorder %s40, %s56
      %p58 = scmp.eq.s32.totalorder %s20, 0
      %p59 = por %p57, %p58
      %s61 = sadd.s32 %s60, 1
      %p64 = scmp.eq.s32.totalorder %s14, 1
      %p65 = scmp.ne.s32.totalorder %s60, %s62
      %p66 = scmp.eq.s32.totalorder %s14, 0
      %p67 = por %p65, %p66
      %p68 = scmp.ne.s32.totalorder %s60, %s62
      %p69 = scmp.eq.s32.totalorder %s19, 1
      %p70 = por %p68, %p69
      %p71 = scmp.ne.s32.totalorder %s62, %s63
      %p72 = scmp.eq.s32.totalorder %s19, 0
      %p73 = por %p71, %p72
      %p74 = scmp.ne.s32.totalorder %s62, %s63
      %p75 = scmp.eq.s32.totalorder %s20, 1
      %p76 = por %p74, %p75
      %p78 = scmp.ne.s32.totalorder %s63, %s77
      %p79 = scmp.eq.s32.totalorder %s20, 0
      %p80 = por %p78, %p79
      %s82 = sadd.s32 %s81, 1
      %p85 = scmp.eq.s32.totalorder %s14, 1
      %p86 = scmp.ne.s32.totalorder %s81, %s83
      %p87 = scmp.eq.s32.totalorder %s14, 0
      %p88 = por %p86, %p87
      %p89 = scmp.ne.s32.totalorder %s81, %s83
      %p90 = scmp.eq.s32.totalorder %s19, 1
      %p91 = por %p89, %p90
      %p92 = scmp.ne.s32.totalorder %s83, %s84
      %p93 = scmp.eq.s32.totalorder %s19, 0
      %p94 = por %p92, %p93
      %p95 = scmp.ne.s32.totalorder %s83, %s84
      %p96 = scmp.eq.s32.totalorder %s20, 1
      %p97 = por %p95, %p96
      %p99 = scmp.ne.s32.totalorder %s84, %s98
      %p100 = scmp.eq.s32.totalorder %s20, 0
      %p101 = por %p99, %p100
      %s103 = sadd.s32 %s102, 1
      %p106 = scmp.eq.s32.totalorder %s14, 1
      %p107 = scmp.ne.s32.totalorder %s102, %s104
      %p108 = scmp.eq.s32.totalorder %s14, 0
      %p109 = por %p107, %p108
      %p110 = scmp.ne.s32.totalorder %s102, %s104
      %p111 = scmp.eq.s32.totalorder %s19, 1
      %p112 = por %p110, %p111
      %p113 = scmp.ne.s32.totalorder %s104, %s105
      %p114 = scmp.eq.s32.totalorder %s19, 0
      %p115 = por %p113, %p114
      %p116 = scmp.ne.s32.totalorder %s104, %s105
      %p117 = scmp.eq.s32.totalorder %s20, 1
      %p118 = por %p116, %p117
      %p120 = scmp.ne.s32.totalorder %s105, %s119
      %p121 = scmp.eq.s32.totalorder %s20, 0
      %p122 = por %p120, %p121
      %s124 = sadd.s32 %s123, 1
      %p127 = scmp.eq.s32.totalorder %s14, 1
      %p128 = scmp.ne.s32.totalorder %s123, %s125
      %p129 = scmp.eq.s32.totalorder %s14, 0
      %p130 = por %p128, %p129
      %p131 = scmp.ne.s32.totalorder %s123, %s125
      %p132 = scmp.eq.s32.totalorder %s19, 1
      %p133 = por %p131, %p132
      %p134 = scmp.ne.s32.totalorder %s125, %s126
      %p135 = scmp.eq.s32.totalorder %s19, 0
      %p136 = por %p134, %p135
      %p137 = scmp.ne.s32.totalorder %s125, %s126
      %p138 = scmp.eq.s32.totalorder %s20, 1
      %p139 = por %p137, %p138
      %p141 = scmp.ne.s32.totalorder %s126, %s140
      %p142 = scmp.eq.s32.totalorder %s20, 0
      %p143 = por %p141, %p142
      %s145 = sadd.s32 %s144, 1
      %p148 = scmp.eq.s32.totalorder %s14, 1
      %p149 = scmp.ne.s32.totalorder %s144, %s146
      %p150 = scmp.eq.s32.totalorder %s14, 0
      %p151 = por %p149, %p150
      %p152 = scmp.ne.s32.totalorder %s144, %s146
      %p153 = scmp.eq.s32.totalorder %s19, 1
      %p154 = por %p152, %p153
      %p155 = scmp.ne.s32.totalorder %s146, %s147
      %p156 = scmp.eq.s32.totalorder %s19, 0
      %p157 = por %p155, %p156
      %p158 = scmp.ne.s32.totalorder %s146, %s147
      %p159 = scmp.eq.s32.totalorder %s20, 1
      %p160 = por %p158, %p159
      %p162 = scmp.ne.s32.totalorder %s147, %s161
      %p163 = scmp.eq.s32.totalorder %s20, 0
      %p164 = por %p162, %p163
      %p165 = scmp.le.s32.totalorder 1, %s14
      %p166 = scmp.lt.s32.totalorder %s14, 3
      %p167 = pnand %p165, %p166
      %p168 = pneg %p167
      // Predicated region
      $region9: #{tpu_custom_call.1} parent=5 // pred_check
        _
      $region10: #{tpu_custom_call.1} parent=5 // pred_check_branch
        %170 = sbr.rel (%p167) target = $region12
      $region11: #{tpu_custom_call.1} parent=5 // pred_region
        %s171 = ssub.s32 %s14, 1
        // Predicated region
        $region13: #{tpu_custom_call.1} parent=11 // pred_check
          %p172 = pneg %p52
        $region14: #{tpu_custom_call.1} parent=11 // pred_check_branch
          %174 = sbr.rel (%p172) target = $region16
        $region15: #{tpu_custom_call.1} parent=11 // pred_region
          %s175 = smul.u32 16, %s24
          %p176 = scmp.lt.s32.totalorder %s175, 15
          %s177 = scalar_select %p176, %s175, 15
          %s178 = smul.addr %s177, 4
          %s179 = scalar_lea.vmem %s0, %s178
          %s180 = smul.u32 16, %s24
        $region16: #{tpu_custom_call.1} parent=11 // pred_fallthru
          _
        // Predicated region
        $region17: #{tpu_custom_call.1} parent=11 // pred_check
          %p181 = pneg %p73
        $region18: #{tpu_custom_call.1} parent=11 // pred_check_branch
          %183 = sbr.rel (%p181) target = $region20
        $region19: #{tpu_custom_call.1} parent=11 // pred_region
          _
        $region20: #{tpu_custom_call.1} parent=11 // pred_fallthru
          _
        // Predicated region
        $region21: #{tpu_custom_call.1} parent=11 // pred_check
          %p184 = pneg %p94
        $region22: #{tpu_custom_call.1} parent=11 // pred_check_branch
          %186 = sbr.rel (%p184) target = $region24
        $region23: #{tpu_custom_call.1} parent=11 // pred_region
          _
        $region24: #{tpu_custom_call.1} parent=11 // pred_fallthru
          _
        // Predicated region
        $region25: #{tpu_custom_call.1} parent=11 // pred_check
          %p187 = pneg %p115
        $region26: #{tpu_custom_call.1} parent=11 // pred_check_branch
          %189 = sbr.rel (%p187) target = $region28
        $region27: #{tpu_custom_call.1} parent=11 // pred_region
          _
        $region28: #{tpu_custom_call.1} parent=11 // pred_fallthru
          _
      $region12: #{tpu_custom_call.1} parent=5 // pred_fallthru
        _
      %p190 = scmp.lt.s32.totalorder %s14, 2
      // Predicated region
      $region29: #{tpu_custom_call.1} parent=5 // pred_check
        %p191 = pneg %p190
      $region30: #{tpu_custom_call.1} parent=5 // pred_check_branch
        %193 = sbr.rel (%p191) target = $region32
      $region31: #{tpu_custom_call.1} parent=5 // pred_region
        _
      $region32: #{tpu_custom_call.1} parent=5 // pred_fallthru
        _
      %p194 = scmp.le.s32.totalorder 1, %s14
      %p195 = scmp.lt.s32.totalorder %s14, 3
      %p196 = pnand %p194, %p195
      %p197 = pneg %p196
      // Predicated region
      $region33: #{tpu_custom_call.1} parent=5 // pred_check
        _
      $region34: #{tpu_custom_call.1} parent=5 // pred_check_branch
        %199 = sbr.rel (%p196) target = $region36
      $region35: #{tpu_custom_call.1} parent=5 // pred_region
        %s200 = ssub.s32 %s14, 1
        %s201 = smul.u32 16, %s24
        %p202 = scmp.lt.s32.totalorder %s201, 15
        %s203 = scalar_select %p202, %s201, 15
        %s204 = smul.addr %s203, 4
        %s205 = scalar_lea.vmem %s0, %s204
        %p206 = pneg %p52
        %p207 = pneg %p49
        %p208 = pneg %p73
        %p209 = pneg %p70
        %p210 = pneg %p94
        %p211 = pneg %p91
        %p212 = pneg %p115
        %p213 = pneg %p112
        %p214 = pneg %p136
        %p215 = pneg %p133
        %p216 = pneg %p157
        %p217 = pneg %p154
        %s218 = smul.u32 16, %s24
        %p219 = scmp.lt.s32.totalorder %s218, 15
        %s220 = scalar_select %p219, %s218, 15
        %s221 = smul.addr %s220, 4
        %s222 = scalar_lea.vmem %s0, %s221
        %s223 = smul.u32 16, %s24
        %s226 = smul.u32 %s24, 128
        %v227 = vld [vmem:[%s222] sm:$0xf]
        %v228 = vld [vmem:[%s222 + $0x4] sm:$0xf]
        %v229 = vld [vmem:[%s222 + $0x8] sm:$0xf]
        %v230 = vld [vmem:[%s222 + $0xc] sm:$0xf]
        %v231 = vld [vmem:[%s222 + $0x10] sm:$0xf]
        %v232 = vld [vmem:[%s222 + $0x14] sm:$0xf]
        %v233 = vld [vmem:[%s222 + $0x18] sm:$0xf]
        %v234 = vld [vmem:[%s222 + $0x1c] sm:$0xf]
        %v235 = vld [vmem:[%s222 + $0x20] sm:$0xf]
        %v236 = vld [vmem:[%s222 + $0x24] sm:$0xf]
        %v237 = vld [vmem:[%s222 + $0x28] sm:$0xf]
        %v238 = vld [vmem:[%s222 + $0x2c] sm:$0xf]
        %v239 = vld [vmem:[%s222 + $0x30] sm:$0xf]
        %v240 = vld [vmem:[%s222 + $0x34] sm:$0xf]
        %v241 = vld [vmem:[%s222 + $0x38] sm:$0xf]
        %v242 = vld [vmem:[%s222 + $0x3c] sm:$0xf]
        %p243 = scmp.eq.s32.totalorder %s23, 0
        // Predicated region
        $region37: #{tpu_custom_call.1} parent=35 // pred_check
          %p244 = pneg %p243
        $region38: #{tpu_custom_call.1} parent=35 // pred_check_branch
          %246 = sbr.rel (%p244) target = $region40
        $region39: #{tpu_custom_call.1} parent=35 // pred_region
          %p247 = scmp.eq.s32.totalorder %s24, 0
          // Predicated region
          $region41: #{tpu_custom_call.1} parent=39 // pred_check
            %p248 = pneg %p247
          $region42: #{tpu_custom_call.1} parent=39 // pred_check_branch
            %250 = sbr.rel (%p248) target = $region44
          $region43: #{tpu_custom_call.1} parent=39 // pred_region
            %251 = vst [vmem:[#allocation3] sm:$0x1] 0.0
          $region44: #{tpu_custom_call.1} parent=39 // pred_fallthru
            _
          %v252 = vld [vmem:[%s1] sm:$0xf]
          %v253 = vld [vmem:[%s1 + $0x4] sm:$0xf]
          %v254 = vld [vmem:[%s1 + $0x8] sm:$0xf]
          %v255 = vld [vmem:[%s1 + $0xc] sm:$0xf]
          %v256 = vld [vmem:[%s1 + $0x10] sm:$0xf]
          %v257 = vld [vmem:[%s1 + $0x14] sm:$0xf]
          %v258 = vld [vmem:[%s1 + $0x18] sm:$0xf]
          %v259 = vld [vmem:[%s1 + $0x1c] sm:$0xf]
          %v260 = vld [vmem:[%s1 + $0x20] sm:$0xf]
          %v261 = vld [vmem:[%s1 + $0x24] sm:$0xf]
          %v262 = vld [vmem:[%s1 + $0x28] sm:$0xf]
          %v263 = vld [vmem:[%s1 + $0x2c] sm:$0xf]
          %v264 = vld [vmem:[%s1 + $0x30] sm:$0xf]
          %v265 = vld [vmem:[%s1 + $0x34] sm:$0xf]
          %v266 = vld [vmem:[%s1 + $0x38] sm:$0xf]
          %v267 = vld [vmem:[%s1 + $0x3c] sm:$0xf]
          %v284 = vunpack.c.l.b16 %v227
          %v285 = vunpack.c.l.b16 %v228
          %v286 = vunpack.c.l.b16 %v229
          %v287 = vunpack.c.l.b16 %v230
          %v288 = vunpack.c.l.b16 %v231
          %v289 = vunpack.c.l.b16 %v232
          %v290 = vunpack.c.l.b16 %v233
          %v291 = vunpack.c.l.b16 %v234
          %v292 = vunpack.c.l.b16 %v235
          %v293 = vunpack.c.l.b16 %v236
          %v294 = vunpack.c.l.b16 %v237
          %v295 = vunpack.c.l.b16 %v238
          %v296 = vunpack.c.l.b16 %v239
          %v297 = vunpack.c.l.b16 %v240
          %v298 = vunpack.c.l.b16 %v241
          %v299 = vunpack.c.l.b16 %v242
          %v300 = vpack.c.b16 %v285, %v284
          %v301 = vpack.c.b16 %v287, %v286
          %v302 = vpack.c.b16 %v289, %v288
          %v303 = vpack.c.b16 %v291, %v290
          %v304 = vpack.c.b16 %v293, %v292
          %v305 = vpack.c.b16 %v295, %v294
          %v306 = vpack.c.b16 %v297, %v296
          %v307 = vpack.c.b16 %v299, %v298
          %v332 = vunpack.c.l.b16 %v252
          %v333 = vunpack.c.l.b16 %v253
          %v334 = vunpack.c.l.b16 %v254
          %v335 = vunpack.c.l.b16 %v255
          %v336 = vunpack.c.l.b16 %v256
          %v337 = vunpack.c.l.b16 %v257
          %v338 = vunpack.c.l.b16 %v258
          %v339 = vunpack.c.l.b16 %v259
          %v340 = vunpack.c.l.b16 %v260
          %v341 = vunpack.c.l.b16 %v261
          %v342 = vunpack.c.l.b16 %v262
          %v343 = vunpack.c.l.b16 %v263
          %v344 = vunpack.c.l.b16 %v264
          %v345 = vunpack.c.l.b16 %v265
          %v346 = vunpack.c.l.b16 %v266
          %v347 = vunpack.c.l.b16 %v267
          %v348 = vpack.c.b16 %v333, %v332
          %v349 = vpack.c.b16 %v335, %v334
          %v350 = vpack.c.b16 %v337, %v336
          %v351 = vpack.c.b16 %v339, %v338
          %v352 = vpack.c.b16 %v341, %v340
          %v353 = vpack.c.b16 %v343, %v342
          %v354 = vpack.c.b16 %v345, %v344
          %v355 = vpack.c.b16 %v347, %v346
          %364 = vmatpush.bf16.msra.mxu0 %v355
          %365 = vmatpush.bf16.msra.mxu0 %v354
          %366 = vmatpush.bf16.msra.mxu0 %v353
          %367 = vmatpush.bf16.msra.mxu0 %v352
          %368 = vmatpush.bf16.msra.mxu0 %v351
          %369 = vmatpush.bf16.msra.mxu0 %v350
          %370 = vmatpush.bf16.msra.mxu0 %v349
          %371 = vmatpush.bf16.msra.mxu0 %v348
          %372 = vmatmul.bf16.gmra.mxu0 %v300
          %v373 = vpop.f32.mrf.mxu0
          %v374 = vadd.f32 0.0, %v373
          %v375 = vpop.f32.mrf.mxu0
          %v376 = vadd.f32 0.0, %v375
          %377 = vmatmul.bf16.gmra.mxu0 %v301
          %v378 = vpop.f32.mrf.mxu0
          %v379 = vadd.f32 0.0, %v378
          %v380 = vpop.f32.mrf.mxu0
          %v381 = vadd.f32 0.0, %v380
          %382 = vmatmul.bf16.gmra.mxu0 %v302
          %v383 = vpop.f32.mrf.mxu0
          %v384 = vadd.f32 0.0, %v383
          %v385 = vpop.f32.mrf.mxu0
          %v386 = vadd.f32 0.0, %v385
          %387 = vmatmul.bf16.gmra.mxu0 %v303
          %v388 = vpop.f32.mrf.mxu0
          %v389 = vadd.f32 0.0, %v388
          %v390 = vpop.f32.mrf.mxu0
          %v391 = vadd.f32 0.0, %v390
          %392 = vmatmul.bf16.gmra.mxu0 %v304
          %v393 = vpop.f32.mrf.mxu0
          %v394 = vadd.f32 0.0, %v393
          %v395 = vpop.f32.mrf.mxu0
          %v396 = vadd.f32 0.0, %v395
          %397 = vmatmul.bf16.gmra.mxu0 %v305
          %v398 = vpop.f32.mrf.mxu0
          %v399 = vadd.f32 0.0, %v398
          %v400 = vpop.f32.mrf.mxu0
          %v401 = vadd.f32 0.0, %v400
          %402 = vmatmul.bf16.gmra.mxu0 %v306
          %v403 = vpop.f32.mrf.mxu0
          %v404 = vadd.f32 0.0, %v403
          %v405 = vpop.f32.mrf.mxu0
          %v406 = vadd.f32 0.0, %v405
          %407 = vmatmul.bf16.gmra.mxu0 %v307
          %v408 = vpop.f32.mrf.mxu0
          %v409 = vadd.f32 0.0, %v408
          %v410 = vpop.f32.mrf.mxu0
          %v411 = vadd.f32 0.0, %v410
          %412 = vdwg.mxu0
          %v413 = vmax.f32 %v374, 0.0
          %v414 = vmax.f32 %v376, 0.0
          %v415 = vmax.f32 %v379, 0.0
          %v416 = vmax.f32 %v381, 0.0
          %v417 = vmax.f32 %v384, 0.0
          %v418 = vmax.f32 %v386, 0.0
          %v419 = vmax.f32 %v389, 0.0
          %v420 = vmax.f32 %v391, 0.0
          %v421 = vmax.f32 %v394, 0.0
          %v422 = vmax.f32 %v396, 0.0
          %v423 = vmax.f32 %v399, 0.0
          %v424 = vmax.f32 %v401, 0.0
          %v425 = vmax.f32 %v404, 0.0
          %v426 = vmax.f32 %v406, 0.0
          %v427 = vmax.f32 %v409, 0.0
          %v428 = vmax.f32 %v411, 0.0
          %v429 = vpack.c.bf16 %v414, %v413
          %v430 = vpack.c.bf16 %v416, %v415
          %v431 = vpack.c.bf16 %v418, %v417
          %v432 = vpack.c.bf16 %v420, %v419
          %v433 = vpack.c.bf16 %v422, %v421
          %v434 = vpack.c.bf16 %v424, %v423
          %v435 = vpack.c.bf16 %v426, %v425
          %v436 = vpack.c.bf16 %v428, %v427
          %v437 = vld [vmem:[%s2] sm:$0xf]
          %vm438 = vcmask 130048
          %v440 = vsel %vm438, %v437, 0
          %v443 = vsel %vm438, %v429, 0
          %v446 = vsel %vm438, %v430, 0
          %v449 = vsel %vm438, %v431, 0
          %v452 = vsel %vm438, %v432, 0
          %v455 = vsel %vm438, %v433, 0
          %v458 = vsel %vm438, %v434, 0
          %v461 = vsel %vm438, %v435, 0
          %v464 = vsel %vm438, %v436, 0
          %466 = vmatpush.bf16.xpose.msra.mxu0 %v464
          %467 = vmatpush.bf16.xpose.msra.mxu0 %v461
          %468 = vmatpush.bf16.xpose.msra.mxu0 %v458
          %469 = vmatpush.bf16.xpose.msra.mxu0 %v455
          %470 = vmatpush.bf16.xpose.msra.mxu0 %v452
          %471 = vmatpush.bf16.xpose.msra.mxu0 %v449
          %472 = vmatpush.bf16.xpose.msra.mxu0 %v446
          %473 = vmatpush.bf16.xpose.msra.mxu0 %v443
          %474 = vmatmul.bf16.gmra.mxu0 %v440
          %v475 = vpop.f32.mrf.mxu0
          %v476 = vadd.f32 0.0, %v475
          %v477 = vpop.f32.mrf.mxu0
          %478 = vdwg.mxu0
          %v479 = vpack.c.bf16 %v476, %v476
          %s480 = sshra.s32 %s226, 7
          %s481 = sand.u32 %s226, 127
          %s482 = smul.addr %s480, 4
          %s483 = scalar_lea.vmem [#allocation2], %s482
          %484 = vst [vmem:[%s483] sm:$0xf] %v479
          %v485 = vld [vmem:[%s3] sm:$0x1]
          %v487 = vsel %vm438, %v485, 0
          %489 = vmatpush.bf16.xpose.msra.mxu0 %v464
          %490 = vmatpush.bf16.xpose.msra.mxu0 %v461
          %491 = vmatpush.bf16.xpose.msra.mxu0 %v458
          %492 = vmatpush.bf16.xpose.msra.mxu0 %v455
          %493 = vmatpush.bf16.xpose.msra.mxu0 %v452
          %494 = vmatpush.bf16.xpose.msra.mxu0 %v449
          %495 = vmatpush.bf16.xpose.msra.mxu0 %v446
          %496 = vmatpush.bf16.xpose.msra.mxu0 %v443
          %497 = vmatmul.bf16.gmra.mxu0 %v487
          %v498 = vpop.f32.mrf.mxu0
          %v499 = vadd.f32 0.0, %v498
          %v500 = vpop.f32.mrf.mxu0
          %501 = vdwg.mxu0
          %s502 = scalar_lea.vmem [#allocation4], %s480
          %503 = vst [vmem:[%s502] sm:$0x1] %v499
          %v504 = vld [vmem:[#allocation3] sm:$0x1]
          %505 = vmatpush.bf16.msra.mxu0 %v307
          %506 = vmatpush.bf16.msra.mxu0 %v306
          %507 = vmatpush.bf16.msra.mxu0 %v305
          %508 = vmatpush.bf16.msra.mxu0 %v304
          %509 = vmatpush.bf16.msra.mxu0 %v303
          %510 = vmatpush.bf16.msra.mxu0 %v302
          %511 = vmatpush.bf16.msra.mxu0 %v301
          %512 = vmatpush.bf16.msra.mxu0 %v300
          %513 = vmatmul.bf16.gmra.mxu0 1065369472
          %v514 = vpop.f32.mrf.mxu0
          %v515 = vadd.f32 0.0, %v514
          %v516 = vpop.f32.mrf.mxu0
          %517 = vdwg.mxu0
          %v518 = vadd.f32 %v504, %v515
          %519 = vst [vmem:[#allocation3] sm:$0x1] %v518
          // Predicated region
          $region45: #{tpu_custom_call.1} parent=39 // pred_check
            %p520 = pneg %p247
          $region46: #{tpu_custom_call.1} parent=39 // pred_check_branch
            %522 = sbr.rel (%p520) target = $region48
          $region47: #{tpu_custom_call.1} parent=39 // pred_region
            %v523 = vld [vmem:[#allocation3] sm:$0x1]
            %v524 = vld [vmem:[#allocation4] sm:$0x1]
            %v525 = vmul.f32 %v523, %v524
            %vm526 = vcmask 1040384
            %v527 = vsel %vm526, %v525, 0.0
            %528 = vadd.xlane.f32.xlu0 %v527
            %v529 = vpop.xlane.xlu0 %528
            %v530 = vrot.slane %v529, 4
            %v531 = vadd.f32 %v529, %v530
            %v532 = vrot.slane %v531, 2
            %v533 = vadd.f32 %v531, %v532
            %v534 = vrot.slane %v533, 1
            %v535 = vadd.f32 %v533, %v534
            %s536 = vtos %v535
            %v537 = vstv %s536
            %v538 = vmul.f32 %v537, 0.003125
            %vm539 = vcmask 0
            %540 = vst.msk [vmem:[#allocation7] sm:$0x1] %vm539, %v538
          $region48: #{tpu_custom_call.1} parent=39 // pred_fallthru
            _
        $region40: #{tpu_custom_call.1} parent=35 // pred_fallthru
          _
        %p541 = scmp.eq.s32.totalorder %s23, 1
        // Predicated region
        $region49: #{tpu_custom_call.1} parent=35 // pred_check
          %p542 = pneg %p541
        $region50: #{tpu_custom_call.1} parent=35 // pred_check_branch
          %544 = sbr.rel (%p542) target = $region52
        $region51: #{tpu_custom_call.1} parent=35 // pred_region
          %p545 = scmp.eq.s32.totalorder %s24, 0
          // Predicated region
          $region53: #{tpu_custom_call.1} parent=51 // pred_check
            %p546 = pneg %p545
          $region54: #{tpu_custom_call.1} parent=51 // pred_check_branch
            %548 = sbr.rel (%p546) target = $region56
          $region55: #{tpu_custom_call.1} parent=51 // pred_region
            %vm549 = vcmask 0
            %550 = vst.msk [vmem:[#allocation5] sm:$0x1] %vm549, -inf
            %551 = vst.msk [vmem:[#allocation6] sm:$0x1] %vm549, 0.0
          $region56: #{tpu_custom_call.1} parent=51 // pred_fallthru
            _
          %v552 = vld [vmem:[#allocation2] sm:$0xf]
          %v569 = vunpack.c.l.b16 %v227
          %v570 = vunpack.c.l.b16 %v228
          %v571 = vunpack.c.l.b16 %v229
          %v572 = vunpack.c.l.b16 %v230
          %v573 = vunpack.c.l.b16 %v231
          %v574 = vunpack.c.l.b16 %v232
          %v575 = vunpack.c.l.b16 %v233
          %v576 = vunpack.c.l.b16 %v234
          %v577 = vunpack.c.l.b16 %v235
          %v578 = vunpack.c.l.b16 %v236
          %v579 = vunpack.c.l.b16 %v237
          %v580 = vunpack.c.l.b16 %v238
          %v581 = vunpack.c.l.b16 %v239
          %v582 = vunpack.c.l.b16 %v240
          %v583 = vunpack.c.l.b16 %v241
          %v584 = vunpack.c.l.b16 %v242
          %v585 = vpack.c.b16 %v570, %v569
          %v586 = vpack.c.b16 %v572, %v571
          %v587 = vpack.c.b16 %v574, %v573
          %v588 = vpack.c.b16 %v576, %v575
          %v589 = vpack.c.b16 %v578, %v577
          %v590 = vpack.c.b16 %v580, %v579
          %v591 = vpack.c.b16 %v582, %v581
          %v592 = vpack.c.b16 %v584, %v583
          %601 = vmatpush.bf16.xpose.msra.mxu0 0
          %602 = vmatpush.bf16.xpose.msra.mxu0 0
          %603 = vmatpush.bf16.xpose.msra.mxu0 0
          %604 = vmatpush.bf16.xpose.msra.mxu0 0
          %605 = vmatpush.bf16.xpose.msra.mxu0 0
          %606 = vmatpush.bf16.xpose.msra.mxu0 0
          %607 = vmatpush.bf16.xpose.msra.mxu0 0
          %608 = vmatpush.bf16.xpose.msra.mxu0 %v552
          %609 = vmatmul.bf16.gmra.mxu0 %v585
          %v610 = vpop.f32.mrf.mxu0
          %v611 = vadd.f32 0.0, %v610
          %v612 = vpop.f32.mrf.mxu0
          %v613 = vadd.f32 0.0, %v612
          %614 = vmatmul.bf16.gmra.mxu0 %v586
          %v615 = vpop.f32.mrf.mxu0
          %v616 = vadd.f32 0.0, %v615
          %v617 = vpop.f32.mrf.mxu0
          %v618 = vadd.f32 0.0, %v617
          %619 = vmatmul.bf16.gmra.mxu0 %v587
          %v620 = vpop.f32.mrf.mxu0
          %v621 = vadd.f32 0.0, %v620
          %v622 = vpop.f32.mrf.mxu0
          %v623 = vadd.f32 0.0, %v622
          %624 = vmatmul.bf16.gmra.mxu0 %v588
          %v625 = vpop.f32.mrf.mxu0
          %v626 = vadd.f32 0.0, %v625
          %v627 = vpop.f32.mrf.mxu0
          %v628 = vadd.f32 0.0, %v627
          %629 = vmatmul.bf16.gmra.mxu0 %v589
          %v630 = vpop.f32.mrf.mxu0
          %v631 = vadd.f32 0.0, %v630
          %v632 = vpop.f32.mrf.mxu0
          %v633 = vadd.f32 0.0, %v632
          %634 = vmatmul.bf16.gmra.mxu0 %v590
          %v635 = vpop.f32.mrf.mxu0
          %v636 = vadd.f32 0.0, %v635
          %v637 = vpop.f32.mrf.mxu0
          %v638 = vadd.f32 0.0, %v637
          %639 = vmatmul.bf16.gmra.mxu0 %v591
          %v640 = vpop.f32.mrf.mxu0
          %v641 = vadd.f32 0.0, %v640
          %v642 = vpop.f32.mrf.mxu0
          %v643 = vadd.f32 0.0, %v642
          %644 = vmatmul.bf16.gmra.mxu0 %v592
          %v645 = vpop.f32.mrf.mxu0
          %v646 = vadd.f32 0.0, %v645
          %v647 = vpop.f32.mrf.mxu0
          %v648 = vadd.f32 0.0, %v647
          %649 = vdwg.mxu0
          %v650 = vlaneseq
          %v651 = vshrl.u32 %v650, 7
          %v652 = vadd.s32 %v651, 8
          %v653 = vadd.s32 %v651, 16
          %v654 = vadd.s32 %v651, 24
          %v655 = vadd.s32 %v651, 32
          %v656 = vadd.s32 %v651, 40
          %v657 = vadd.s32 %v651, 48
          %v658 = vadd.s32 %v651, 56
          %v659 = vadd.s32 %v651, 64
          %v660 = vadd.s32 %v651, 72
          %v661 = vadd.s32 %v651, 80
          %v662 = vadd.s32 %v651, 88
          %v663 = vadd.s32 %v651, 96
          %v664 = vadd.s32 %v651, 104
          %v665 = vadd.s32 %v651, 112
          %v666 = vadd.s32 %v651, 120
          %v667 = vstv %s226
          %v668 = vadd.s32 %v667, %v651
          %v669 = vadd.s32 %v667, %v652
          %v670 = vadd.s32 %v667, %v653
          %v671 = vadd.s32 %v667, %v654
          %v672 = vadd.s32 %v667, %v655
          %v673 = vadd.s32 %v667, %v656
          %v674 = vadd.s32 %v667, %v657
          %v675 = vadd.s32 %v667, %v658
          %v676 = vadd.s32 %v667, %v659
          %v677 = vadd.s32 %v667, %v660
          %v678 = vadd.s32 %v667, %v661
          %v679 = vadd.s32 %v667, %v662
          %v680 = vadd.s32 %v667, %v663
          %v681 = vadd.s32 %v667, %v664
          %v682 = vadd.s32 %v667, %v665
          %v683 = vadd.s32 %v667, %v666
          %vm684 = vcmp.lt.s32.totalorder %v668, 40
          %vm685 = vcmp.lt.s32.totalorder %v669, 40
          %vm686 = vcmp.lt.s32.totalorder %v670, 40
          %vm687 = vcmp.lt.s32.totalorder %v671, 40
          %vm688 = vcmp.lt.s32.totalorder %v672, 40
          %vm689 = vcmp.lt.s32.totalorder %v673, 40
          %vm690 = vcmp.lt.s32.totalorder %v674, 40
          %vm691 = vcmp.lt.s32.totalorder %v675, 40
          %vm692 = vcmp.lt.s32.totalorder %v676, 40
          %vm693 = vcmp.lt.s32.totalorder %v677, 40
          %vm694 = vcmp.lt.s32.totalorder %v678, 40
          %vm695 = vcmp.lt.s32.totalorder %v679, 40
          %vm696 = vcmp.lt.s32.totalorder %v680, 40
          %vm697 = vcmp.lt.s32.totalorder %v681, 40
          %vm698 = vcmp.lt.s32.totalorder %v682, 40
          %vm699 = vcmp.lt.s32.totalorder %v683, 40
          %v700 = vsel %vm684, %v611, -inf
          %v701 = vsel %vm685, %v613, -inf
          %v702 = vsel %vm686, %v616, -inf
          %v703 = vsel %vm687, %v618, -inf
          %v704 = vsel %vm688, %v621, -inf
          %v705 = vsel %vm689, %v623, -inf
          %v706 = vsel %vm690, %v626, -inf
          %v707 = vsel %vm691, %v628, -inf
          %v708 = vsel %vm692, %v631, -inf
          %v709 = vsel %vm693, %v633, -inf
          %v710 = vsel %vm694, %v636, -inf
          %v711 = vsel %vm695, %v638, -inf
          %v712 = vsel %vm696, %v641, -inf
          %v713 = vsel %vm697, %v643, -inf
          %v714 = vsel %vm698, %v646, -inf
          %v715 = vsel %vm699, %v648, -inf
          %v716 = vld [vmem:[#allocation5] sm:$0x1]
          %v717 = vld [vmem:[#allocation6] sm:$0x1]
          %vm718 = vcmask 64512
          %v719 = vsel %vm718, %v700, -inf
          %v720 = vsel %vm718, %v701, -inf
          %v721 = vsel %vm718, %v702, -inf
          %v722 = vsel %vm718, %v703, -inf
          %v723 = vsel %vm718, %v704, -inf
          %v724 = vmax.f32 %v719, %v723
          %v725 = vsel %vm718, %v705, -inf
          %v726 = vmax.f32 %v720, %v725
          %v727 = vsel %vm718, %v706, -inf
          %v728 = vmax.f32 %v721, %v727
          %v729 = vsel %vm718, %v707, -inf
          %v730 = vmax.f32 %v722, %v729
          %v731 = vsel %vm718, %v708, -inf
          %v732 = vmax.f32 %v724, %v731
          %v733 = vsel %vm718, %v709, -inf
          %v734 = vmax.f32 %v726, %v733
          %v735 = vsel %vm718, %v710, -inf
          %v736 = vmax.f32 %v728, %v735
          %v737 = vsel %vm718, %v711, -inf
          %v738 = vmax.f32 %v730, %v737
          %v739 = vsel %vm718, %v712, -inf
          %v740 = vmax.f32 %v732, %v739
          %v741 = vsel %vm718, %v713, -inf
          %v742 = vmax.f32 %v734, %v741
          %v743 = vsel %vm718, %v714, -inf
          %v744 = vmax.f32 %v736, %v743
          %v745 = vsel %vm718, %v715, -inf
          %v746 = vmax.f32 %v738, %v745
          %v747 = vmax.f32 %v740, %v742
          %v748 = vmax.f32 %v744, %v746
          %v749 = vmax.f32 %v747, %v748
          %750 = vmax.xlane.f32.xlu0 %v749
          %v751 = vpop.xlane.xlu0 %750
          %v752 = vrot.slane %v751, 4
          %v753 = vmax.f32 %v751, %v752
          %v754 = vrot.slane %v753, 2
          %v755 = vmax.f32 %v753, %v754
          %v756 = vrot.slane %v755, 1
          %v757 = vmax.f32 %v755, %v756
          %s758 = vtos %v757
          %v759 = vstv %s758
          %v760 = vmax.f32 %v716, %v759
          %v761 = vsub.f32 %v716, %v760
          %v762 = vmul.f32 %v761, 1.442695
          %v763 = vpow.pop %v762
          %v764 = vmul.f32 %v717, %v763
          %v766 = vperm.slane %v760, 0
          %767 = vset.pattern.permute.xlu0 0
          %768 = vperm.xlu0 %767, %v766
          %v769 = vpop.permute.xlu0 %768
          %v771 = vsub.f32 %v700, %v769
          %v772 = vsub.f32 %v701, %v769
          %v773 = vsub.f32 %v702, %v769
          %v774 = vsub.f32 %v703, %v769
          %v775 = vsub.f32 %v704, %v769
          %v776 = vsub.f32 %v705, %v769
          %v777 = vsub.f32 %v706, %v769
          %v778 = vsub.f32 %v707, %v769
          %v779 = vsub.f32 %v708, %v769
          %v780 = vsub.f32 %v709, %v769
          %v781 = vsub.f32 %v710, %v769
          %v782 = vsub.f32 %v711, %v769
          %v783 = vsub.f32 %v712, %v769
          %v784 = vsub.f32 %v713, %v769
          %v785 = vsub.f32 %v714, %v769
          %v786 = vsub.f32 %v715, %v769
          %v787 = vmul.f32 %v771, 1.442695
          %v788 = vpow.pop %v787
          %v789 = vmul.f32 %v772, 1.442695
          %v790 = vpow.pop %v789
          %v791 = vmul.f32 %v773, 1.442695
          %v792 = vpow.pop %v791
          %v793 = vmul.f32 %v774, 1.442695
          %v794 = vpow.pop %v793
          %v795 = vmul.f32 %v775, 1.442695
          %v796 = vpow.pop %v795
          %v797 = vmul.f32 %v776, 1.442695
          %v798 = vpow.pop %v797
          %v799 = vmul.f32 %v777, 1.442695
          %v800 = vpow.pop %v799
          %v801 = vmul.f32 %v778, 1.442695
          %v802 = vpow.pop %v801
          %v803 = vmul.f32 %v779, 1.442695
          %v804 = vpow.pop %v803
          %v805 = vmul.f32 %v780, 1.442695
          %v806 = vpow.pop %v805
          %v807 = vmul.f32 %v781, 1.442695
          %v808 = vpow.pop %v807
          %v809 = vmul.f32 %v782, 1.442695
          %v810 = vpow.pop %v809
          %v811 = vmul.f32 %v783, 1.442695
          %v812 = vpow.pop %v811
          %v813 = vmul.f32 %v784, 1.442695
          %v814 = vpow.pop %v813
          %v815 = vmul.f32 %v785, 1.442695
          %v816 = vpow.pop %v815
          %v817 = vmul.f32 %v786, 1.442695
          %v818 = vpow.pop %v817
          %v819 = vsel %vm718, %v788, 0.0
          %v820 = vsel %vm718, %v790, 0.0
          %v821 = vadd.f32 %v819, %v820
          %v822 = vsel %vm718, %v792, 0.0
          %v823 = vadd.f32 %v821, %v822
          %v824 = vsel %vm718, %v794, 0.0
          %v825 = vadd.f32 %v823, %v824
          %v826 = vsel %vm718, %v796, 0.0
          %v827 = vadd.f32 %v825, %v826
          %v828 = vsel %vm718, %v798, 0.0
          %v829 = vadd.f32 %v827, %v828
          %v830 = vsel %vm718, %v800, 0.0
          %v831 = vadd.f32 %v829, %v830
          %v832 = vsel %vm718, %v802, 0.0
          %v833 = vadd.f32 %v831, %v832
          %v834 = vsel %vm718, %v804, 0.0
          %v835 = vadd.f32 %v833, %v834
          %v836 = vsel %vm718, %v806, 0.0
          %v837 = vadd.f32 %v835, %v836
          %v838 = vsel %vm718, %v808, 0.0
          %v839 = vadd.f32 %v837, %v838
          %v840 = vsel %vm718, %v810, 0.0
          %v841 = vadd.f32 %v839, %v840
          %v842 = vsel %vm718, %v812, 0.0
          %v843 = vadd.f32 %v841, %v842
          %v844 = vsel %vm718, %v814, 0.0
          %v845 = vadd.f32 %v843, %v844
          %v846 = vsel %vm718, %v816, 0.0
          %v847 = vadd.f32 %v845, %v846
          %v848 = vsel %vm718, %v818, 0.0
          %v849 = vadd.f32 %v847, %v848
          %850 = vadd.xlane.f32.xlu0 %v849
          %v851 = vpop.xlane.xlu0 %850
          %v852 = vrot.slane %v851, 4
          %v853 = vadd.f32 %v851, %v852
          %v854 = vrot.slane %v853, 2
          %v855 = vadd.f32 %v853, %v854
          %v856 = vrot.slane %v855, 1
          %v857 = vadd.f32 %v855, %v856
          %s858 = vtos %v857
          %v859 = vstv %s858
          %v860 = vadd.f32 %v764, %v859
          %vm861 = vcmask 0
          %862 = vst.msk [vmem:[#allocation5] sm:$0x1] %vm861, %v760
          %863 = vst.msk [vmem:[#allocation6] sm:$0x1] %vm861, %v860
          // Predicated region
          $region57: #{tpu_custom_call.1} parent=51 // pred_check
            %p864 = pneg %p545
          $region58: #{tpu_custom_call.1} parent=51 // pred_check_branch
            %866 = sbr.rel (%p864) target = $region60
          $region59: #{tpu_custom_call.1} parent=51 // pred_region
            %v867 = vlog2.pop %v860
            %v868 = vmul.f32 %v867, 0.6931472
            %v869 = vadd.f32 %v760, %v868
            %v870 = vsub.f32 %v869, 5.768321
            %871 = vst.msk [vmem:[#allocation9] sm:$0x1] %vm861, %v870
          $region60: #{tpu_custom_call.1} parent=51 // pred_fallthru
            _
        $region52: #{tpu_custom_call.1} parent=35 // pred_fallthru
          _
        // Predicated region
        $region61: #{tpu_custom_call.1} parent=35 // pred_check
          %p872 = pneg %p133
        $region62: #{tpu_custom_call.1} parent=35 // pred_check_branch
          %874 = sbr.rel (%p872) target = $region64
        $region63: #{tpu_custom_call.1} parent=35 // pred_region
          %876 = vsyncadd [#allocation8], 0
          %s878 = sshll.u32 [#allocation7], 4
          %s879 = int_to_ptr.vmem [resolvable:$true] %s878
          %s880 = sshll.u32 %s4, 4
          %s881 = int_to_ptr.hbm [resolvable:$true] %s880
          %883 = dma.vmem_to_hbm [thread:$0]  %s879, 16, %s881, [#allocation8]
        $region64: #{tpu_custom_call.1} parent=35 // pred_fallthru
          _
        // Predicated region
        $region65: #{tpu_custom_call.1} parent=35 // pred_check
          %p884 = pneg %p154
        $region66: #{tpu_custom_call.1} parent=35 // pred_check_branch
          %886 = sbr.rel (%p884) target = $region68
        $region67: #{tpu_custom_call.1} parent=35 // pred_region
          %888 = vsyncadd [#allocation10], 0
          %s890 = sshll.u32 [#allocation9], 4
          %s891 = int_to_ptr.vmem [resolvable:$true] %s890
          %s892 = sshll.u32 %s5, 4
          %s893 = int_to_ptr.hbm [resolvable:$true] %s892
          %895 = dma.vmem_to_hbm [thread:$0]  %s891, 16, %s893, [#allocation10]
        $region68: #{tpu_custom_call.1} parent=35 // pred_fallthru
          _
        // Predicated region
        $region69: #{tpu_custom_call.1} parent=35 // pred_check
          %p896 = pneg %p133
        $region70: #{tpu_custom_call.1} parent=35 // pred_check_branch
          %898 = sbr.rel (%p896) target = $region72
        $region71: #{tpu_custom_call.1} parent=35 // pred_region
          %900 = dma.done [#allocation8], 16
        $region72: #{tpu_custom_call.1} parent=35 // pred_fallthru
          _
        // Predicated region
        $region73: #{tpu_custom_call.1} parent=35 // pred_check
          %p901 = pneg %p154
        $region74: #{tpu_custom_call.1} parent=35 // pred_check_branch
          %903 = sbr.rel (%p901) target = $region76
        $region75: #{tpu_custom_call.1} parent=35 // pred_region
          %905 = dma.done [#allocation10], 16
        $region76: #{tpu_custom_call.1} parent=35 // pred_fallthru
          _
      $region36: #{tpu_custom_call.1} parent=5 // pred_fallthru
        _
      %p906 = scmp.le.s32.totalorder 2, %s14
      // Predicated region
      $region77: #{tpu_custom_call.1} parent=5 // pred_check
        %p907 = pneg %p906
      $region78: #{tpu_custom_call.1} parent=5 // pred_check_branch
        %909 = sbr.rel (%p907) target = $region80
      $region79: #{tpu_custom_call.1} parent=5 // pred_region
        %s910 = ssub.s32 %s14, 2
      $region80: #{tpu_custom_call.1} parent=5 // pred_fallthru
        _
    $region6: #{tpu_custom_call.1} parent=1 // loop_footer
      %s18 = sadd.s32 1, %s14
    $region7: #{tpu_custom_call.1} parent=1 // loop_footer_branch
      %13 = sbr.rel target = $region3
    $region8: #{tpu_custom_call.1} parent=1 // loop_exit
      _
    %911 = vsyncpa [#allocation8], 1
    %s912 = scalar_lea.sflag [#allocation8], 1
    %913 = vsyncpa %s912, 1
    %914 = vsyncpa [#allocation10], 1

</llo_original>
